<compile_context>
chip_gen: v7x
topology: tpu7x:2x2x1
jax: 0.10.0
libtpu: 0.0.40
codegen_flags: <defaults>
</compile_context>

<pallas_src>
import functools

import jax
import jax.numpy as jnp
from jax import lax
from jax.experimental import pallas as pl
from jax.experimental.pallas import tpu as pltpu

_VMEM_LIMIT = 32 * 1024 * 1024
_MIN_PALLAS_BYTES = 64 * 1024     # below this, plain XLA beats kernel dispatch


# ----------------------------- device heuristics ---------------------------

def _device_kind():
    try:
        return jax.devices()[0].device_kind.lower()
    except Exception:
        return ""


def _num_tensorcores():
    kind = _device_kind()
    # 2 TensorCores per chip on v4 / v5p / v7x; 1 on v5e / v6e.
    if ("v4" in kind) or ("v5p" in kind) or ("v7" in kind) or ("7x" in kind):
        return 2
    return 1


def _default_block_bytes():
    kind = _device_kind()
    if ("v5 lite" in kind) or ("v5e" in kind) or ("v5lite" in kind):
        return 2 * 1024 * 1024    # v5e: 16 MiB scoped-VMEM default, be modest
    return 4 * 1024 * 1024        # v6e / v7x


def _choose_lanes(n):
    """Largest 128-multiple divisor of n such that rows = n // lanes is a
    multiple of 8 (no padding needed anywhere).  None if no factorization."""
    for lanes in (1024, 512, 256, 128):
        if n % lanes == 0 and (n // lanes) % 8 == 0:
            return lanes
    return None


# ----------------------------- Pallas kernels ------------------------------

def _partial_sums_kernel(x_ref, sum_ref, sq_ref, acc_ref, acc2_ref, *,
                         block_rows, steps, total_rows, ragged):
    """Per-split global sum / sum-of-squares with (8, lanes) VMEM accumulators."""
    i = pl.program_id(1)

    @pl.when(i == 0)
    def _():
        acc_ref[...] = jnp.zeros_like(acc_ref)
        acc2_ref[...] = jnp.zeros_like(acc2_ref)

    xv = x_ref[...].astype(jnp.float32)
    if ragged:
        # Mask rows past the true end of the array (last block only).
        block = pl.program_id(0) * steps + i
        row_ids = block * block_rows + lax.broadcasted_iota(jnp.int32, xv.shape, 0)
        xv = jnp.where(row_ids < total_rows, xv, 0.0)

    # Pre-reduce across sublane groups: keeps (8, lanes) tiles intact (no
    # relayout), turns ~block_rows accumulator stores per step into 8.
    xg = xv.reshape(block_rows // 8, 8, xv.shape[-1])
    acc_ref[...] += xg.sum(axis=0)
    acc2_ref[...] += (xg * xg).sum(axis=0)

    @pl.when(i == pl.num_programs(1) - 1)
    def _():
        sum_ref[...] = jnp.broadcast_to(jnp.sum(acc_ref[...]), sum_ref.shape)
        sq_ref[...] = jnp.broadcast_to(jnp.sum(acc2_ref[...]), sq_ref.shape)


def _affine_kernel(ab_ref, x_ref, o_ref):
    """Fused composed BN+residual x2: out = x * A + B (A, B precomputed)."""
    a = ab_ref[0]
    b = ab_ref[1]
    o_ref[...] = (x_ref[...].astype(jnp.float32) * a + b).astype(o_ref.dtype)


# ------------------------------ JAX wrappers -------------------------------

def _global_sums(x2d, block_rows, nsplit, steps, ragged):
    rows, lanes = x2d.shape
    kernel = functools.partial(
        _partial_sums_kernel, block_rows=block_rows, steps=steps,
        total_rows=rows, ragged=ragged)
    psum, psq = pl.pallas_call(
        kernel,
        out_shape=(jax.ShapeDtypeStruct((nsplit, 8, 128), jnp.float32),
                   jax.ShapeDtypeStruct((nsplit, 8, 128), jnp.float32)),
        grid=(nsplit, steps),
        in_specs=[pl.BlockSpec((block_rows, lanes),
                               lambda s, i: (s * steps + i, 0))],
        out_specs=(pl.BlockSpec((1, 8, 128), lambda s, i: (s, 0, 0)),
                   pl.BlockSpec((1, 8, 128), lambda s, i: (s, 0, 0))),
        scratch_shapes=[pltpu.VMEM((8, lanes), jnp.float32),
                        pltpu.VMEM((8, lanes), jnp.float32)],
        compiler_params=pltpu.CompilerParams(
            dimension_semantics=("parallel", "arbitrary"),
            vmem_limit_bytes=_VMEM_LIMIT),
    )(x2d)
    return jnp.sum(psum[:, 0, 0]), jnp.sum(psq[:, 0, 0])


def _affine_2d(x2d, a, b, block_rows):
    rows, lanes = x2d.shape
    ab = jnp.stack([a, b]).astype(jnp.float32)
    n_blocks = (rows + block_rows - 1) // block_rows
    return pl.pallas_call(
        _affine_kernel,
        out_shape=jax.ShapeDtypeStruct((rows, lanes), x2d.dtype),
        grid=(n_blocks,),
        in_specs=[pl.BlockSpec(memory_space=pltpu.MemorySpace.SMEM),
                  pl.BlockSpec((block_rows, lanes), lambda i: (i, 0))],
        out_specs=pl.BlockSpec((block_rows, lanes), lambda i: (i, 0)),
        compiler_params=pltpu.CompilerParams(
            dimension_semantics=("parallel",),
            vmem_limit_bytes=_VMEM_LIMIT),
    )(ab, x2d)


def _compose_affine(s1, s2, n, gamma, beta, gamma2, beta2, eps):
    """Analytic composition of the two BN+residual stages into out = A*x + B."""
    nf = jnp.float32(n)
    mean1 = s1 / nf
    # NOTE: E[x^2]-mean^2 (biased variance) matches PyTorch train-mode BN; it
    # can cancel when |mean| >> std (robustness note, same as the reference).
    var1 = s2 / nf - mean1 * mean1

    g1 = jnp.asarray(gamma, jnp.float32)
    b1 = jnp.asarray(beta, jnp.float32)
    g2 = jnp.asarray(gamma2, jnp.float32)
    b2 = jnp.asarray(beta2, jnp.float32)
    epsf = jnp.float32(eps)

    # Stage 1: out1 = BN(x) + x = a1*x + c1
    scale1 = g1 * lax.rsqrt(var1 + epsf)
    shift1 = b1 - mean1 * scale1
    a1 = 1.0 + scale1
    c1 = shift1

    # Stage 2 statistics derived analytically (out1 is affine in x).
    mean2 = a1 * mean1 + c1
    var2 = a1 * a1 * var1
    scale2 = g2 * lax.rsqrt(var2 + epsf)
    shift2 = b2 - mean2 * scale2

    A = a1 * (1.0 + scale2)
    B = c1 * (1.0 + scale2) + shift2
    return A, B


def dual_rnn_attention_forward(x, gamma, beta, eps=1e-5, gamma2=None, beta2=None,
                               *, force_pallas=False, max_block_bytes=None):
    """Forward pass of DualRNN_Attention with use_att=use_rnn=False.

    The module shares one BatchNorm1d(1) for both stages, so gamma2/beta2
    default to gamma/beta; they are accepted separately for generality.
    """
    if gamma2 is None:
        gamma2 = gamma
    if beta2 is None:
        beta2 = beta

    orig_shape = x.shape
    n = x.size
    lanes = _choose_lanes(n)
    nbytes = n * x.dtype.itemsize

    if lanes is None or (not force_pallas and nbytes < _MIN_PALLAS_BYTES):
        # Plain-XLA fallback: tiny tensors (dispatch/grid overhead dominates)
        # or total sizes with no lane-dense factorization.
        # TODO(synk): ragged total sizes could also use a padded Pallas path.
        xf = x.astype(jnp.float32)
        s1 = jnp.sum(xf)
        s2 = jnp.sum(xf * xf)
        A, B = _compose_affine(s1, s2, n, gamma, beta, gamma2, beta2, eps)
        return (xf * A + B).astype(x.dtype).reshape(orig_shape)

    rows = n // lanes                       # exact: no padding anywhere
    if max_block_bytes is None:
        max_block_bytes = _default_block_bytes()
    block_rows = max(8, (max_block_bytes // (4 * lanes)) // 8 * 8)
    block_rows = min(block_rows, rows)

    total_blocks = (rows + block_rows - 1) // block_rows
    ragged = (rows % block_rows) != 0
    nsplit = 2 if (_num_tensorcores() == 2 and total_blocks >= 2
                   and total_blocks % 2 == 0) else 1
    steps = total_blocks // nsplit

    x2d = x.reshape(rows, lanes)            # free view, no copy / pad

    # Single reduction pass over x, then one fused affine pass.
    s1, s2 = _global_sums(x2d, block_rows, nsplit, steps, ragged)
    A, B = _compose_affine(s1, s2, n, gamma, beta, gamma2, beta2, eps)
    out2d = _affine_2d(x2d, A, B, block_rows)
    return out2d.reshape(orig_shape)


# Pure-JAX reference (two explicit BN+residual passes) for validation.
def _reference(x, gamma, beta, eps=1e-5):
    def bn_res(v, g, b):
        m = jnp.mean(v)
        var = jnp.mean(jnp.square(v)) - m * m
        return (v - m) * lax.rsqrt(var + eps) * g + b + v
    out1 = bn_res(x, gamma, beta)
    return bn_res(out1, gamma, beta)


if __name__ == "__main__":
    key = jax.random.PRNGKey(0)

    # BatchNorm1d(1) parameters, PyTorch-default init.
    gamma = jnp.float32(1.0)
    beta = jnp.float32(0.0)

    # Primary check: small module-consistent shape (B, W=d_model, T, F).
    B, W, T, F = 2, 4, 16, 16
    x = jax.random.normal(key, (B, W, T, F), dtype=jnp.float32)
    fwd = jax.jit(functools.partial(dual_rnn_attention_forward, force_pallas=True))
    out = jax.block_until_ready(fwd(x, gamma, beta))
    assert out.shape == (B, W, T, F)
    ref = _reference(x, gamma, beta)
    assert jnp.allclose(out, ref, atol=1e-4, rtol=1e-4), "mismatch vs reference"

    # Secondary check: multi-step grid + ragged last row-block (a small block
    # override keeps the tensor small while exercising the boundary paths).
    x2 = jax.random.normal(jax.random.PRNGKey(0), (2, 4, 24, 64), dtype=jnp.float32)
    fwd2 = jax.jit(functools.partial(dual_rnn_attention_forward,
                                     force_pallas=True, max_block_bytes=32 * 1024))
    out2 = jax.block_until_ready(fwd2(x2, gamma, beta))
    ref2 = _reference(x2, gamma, beta)
    assert jnp.allclose(out2, ref2, atol=1e-4, rtol=1e-4), "mismatch vs reference (ragged)"

    print("KERNEL_OK")
</pallas_src>

<mosaic_0001>
module attributes {stable_mosaic.version = 11 : i64} {
  func.func @_partial_sums_kernel(%arg0: i32, %arg1: i32, %arg2: memref<8x256xf32, #tpu.memory_space<vmem>>, %arg3: memref<1x8x128xf32, #tpu.memory_space<vmem>>, %arg4: memref<1x8x128xf32, #tpu.memory_space<vmem>>, %arg5: memref<8x256xf32, #tpu.memory_space<vmem>>, %arg6: memref<8x256xf32, #tpu.memory_space<vmem>>) attributes {dimension_semantics = [#tpu.dimension_semantics<parallel>, #tpu.dimension_semantics<arbitrary>], iteration_bounds = array<i64: 1, 1>, scalar_prefetch = 0 : i64, scratch_operands = 2 : i64, tpu.core_type = #tpu.core_type<tc>, window_params = [{transform_indices = @transform_0, window_bounds = array<i64: 8, 256>}, {transform_indices = @transform_1, window_bounds = array<i64: 1, 8, 128>}, {transform_indices = @transform_2, window_bounds = array<i64: 1, 8, 128>}]} {
    %c0_i32 = arith.constant 0 : i32
    %0 = arith.cmpi eq, %arg1, %c0_i32 : i32
    %1 = arith.extui %0 : i1 to i32
    %c0_i32_0 = arith.constant 0 : i32
    %2 = arith.cmpi ne, %1, %c0_i32_0 : i32
    scf.if %2 {
      %cst_13 = arith.constant 0.000000e+00 : f32
      %17 = vector.broadcast %cst_13 : f32 to vector<8x256xf32>
      %c0_14 = arith.constant 0 : index
      %c0_15 = arith.constant 0 : index
      %18 = vector.load %arg5[%c0_14, %c0_15] : memref<8x256xf32, #tpu.memory_space<vmem>>, vector<8x256xf32>
      tpu.vector_store %arg5[%c0_14, %c0_15], %17 {strides = array<i32>} : memref<8x256xf32, #tpu.memory_space<vmem>>, vector<8x256xf32>,
      %cst_16 = arith.constant 0.000000e+00 : f32
      %19 = vector.broadcast %cst_16 : f32 to vector<8x256xf32>
      %c0_17 = arith.constant 0 : index
      %c0_18 = arith.constant 0 : index
      %20 = vector.load %arg6[%c0_17, %c0_18] : memref<8x256xf32, #tpu.memory_space<vmem>>, vector<8x256xf32>
      tpu.vector_store %arg6[%c0_17, %c0_18], %19 {strides = array<i32>} : memref<8x256xf32, #tpu.memory_space<vmem>>, vector<8x256xf32>,
    } else {
    }
    %c0 = arith.constant 0 : index
    %c0_1 = arith.constant 0 : index
    %3 = vector.load %arg2[%c0, %c0_1] : memref<8x256xf32, #tpu.memory_space<vmem>>, vector<8x256xf32>
    %4 = vector.shape_cast %3 : vector<8x256xf32> to vector<1x8x256xf32>
    %c0_2 = arith.constant 0 : index
    %c0_3 = arith.constant 0 : index
    %5 = vector.load %arg5[%c0_2, %c0_3] : memref<8x256xf32, #tpu.memory_space<vmem>>, vector<8x256xf32>
    %cst = arith.constant dense<0.000000e+00> : vector<8x256xf32>
    %6 = vector.multi_reduction <add>, %4, %cst [0] : vector<1x8x256xf32> to vector<8x256xf32>
    %7 = arith.addf %5, %6 : vector<8x256xf32>
    %c0_4 = arith.constant 0 : index
    %c0_5 = arith.constant 0 : index
    %8 = vector.load %arg5[%c0_4, %c0_5] : memref<8x256xf32, #tpu.memory_space<vmem>>, vector<8x256xf32>
    tpu.vector_store %arg5[%c0_4, %c0_5], %7 {strides = array<i32>} : memref<8x256xf32, #tpu.memory_space<vmem>>, vector<8x256xf32>,
    %c0_6 = arith.constant 0 : index
    %c0_7 = arith.constant 0 : index
    %9 = vector.load %arg6[%c0_6, %c0_7] : memref<8x256xf32, #tpu.memory_space<vmem>>, vector<8x256xf32>
    %10 = arith.mulf %4, %4 : vector<1x8x256xf32>
    %cst_8 = arith.constant dense<0.000000e+00> : vector<8x256xf32>
    %11 = vector.multi_reduction <add>, %10, %cst_8 [0] : vector<1x8x256xf32> to vector<8x256xf32>
    %12 = arith.addf %9, %11 : vector<8x256xf32>
    %c0_9 = arith.constant 0 : index
    %c0_10 = arith.constant 0 : index
    %13 = vector.load %arg6[%c0_9, %c0_10] : memref<8x256xf32, #tpu.memory_space<vmem>>, vector<8x256xf32>
    tpu.vector_store %arg6[%c0_9, %c0_10], %12 {strides = array<i32>} : memref<8x256xf32, #tpu.memory_space<vmem>>, vector<8x256xf32>,
    %c0_i32_11 = arith.constant 0 : i32
    %14 = arith.cmpi eq, %arg1, %c0_i32_11 : i32
    %15 = arith.extui %14 : i1 to i32
    %c0_i32_12 = arith.constant 0 : i32
    %16 = arith.cmpi ne, %15, %c0_i32_12 : i32
    scf.if %16 {
      %c0_13 = arith.constant 0 : index
      %c0_14 = arith.constant 0 : index
      %17 = vector.load %arg5[%c0_13, %c0_14] : memref<8x256xf32, #tpu.memory_space<vmem>>, vector<8x256xf32>
      %18 = vector.shape_cast %17 : vector<8x256xf32> to vector<1x8x256xf32>
      %cst_15 = arith.constant dense<0.000000e+00> : vector<1xf32>
      %19 = vector.multi_reduction <add>, %18, %cst_15 [1, 2] : vector<1x8x256xf32> to vector<1xf32>
      %20 = vector.shape_cast %19 : vector<1xf32> to vector<1x1x1xf32>
      %21 = vector.extract %20[0, 0, 0] : f32 from vector<1x1x1xf32>
      %22 = vector.broadcast %21 : f32 to vector<1x8x128xf32>
      %c0_16 = arith.constant 0 : index
      %c0_17 = arith.constant 0 : index
      %c0_18 = arith.constant 0 : index
      %23 = vector.load %arg3[%c0_16, %c0_17, %c0_18] : memref<1x8x128xf32, #tpu.memory_space<vmem>>, vector<1x8x128xf32>
      tpu.vector_store %arg3[%c0_16, %c0_17, %c0_18], %22 {strides = array<i32>} : memref<1x8x128xf32, #tpu.memory_space<vmem>>, vector<1x8x128xf32>,
      %c0_19 = arith.constant 0 : index
      %c0_20 = arith.constant 0 : index
      %24 = vector.load %arg6[%c0_19, %c0_20] : memref<8x256xf32, #tpu.memory_space<vmem>>, vector<8x256xf32>
      %25 = vector.shape_cast %24 : vector<8x256xf32> to vector<1x8x256xf32>
      %cst_21 = arith.constant dense<0.000000e+00> : vector<1xf32>
      %26 = vector.multi_reduction <add>, %25, %cst_21 [1, 2] : vector<1x8x256xf32> to vector<1xf32>
      %27 = vector.shape_cast %26 : vector<1xf32> to vector<1x1x1xf32>
      %28 = vector.extract %27[0, 0, 0] : f32 from vector<1x1x1xf32>
      %29 = vector.broadcast %28 : f32 to vector<1x8x128xf32>
      %c0_22 = arith.constant 0 : index
      %c0_23 = arith.constant 0 : index
      %c0_24 = arith.constant 0 : index
      %30 = vector.load %arg4[%c0_22, %c0_23, %c0_24] : memref<1x8x128xf32, #tpu.memory_space<vmem>>, vector<1x8x128xf32>
      tpu.vector_store %arg4[%c0_22, %c0_23, %c0_24], %29 {strides = array<i32>} : memref<1x8x128xf32, #tpu.memory_space<vmem>>, vector<1x8x128xf32>,
    } else {
    }
    return
  }
  func.func @transform_0(%arg0: i32, %arg1: i32) -> (i32, i32) {
    %c1_i32 = arith.constant 1 : i32
    %0 = arith.muli %arg0, %c1_i32 : i32
    %1 = arith.addi %0, %arg1 : i32
    %c0_i32 = arith.constant 0 : i32
    %c0_i32_0 = arith.constant 0 : i32
    return %1, %c0_i32 : i32, i32
  }
  func.func @transform_1(%arg0: i32, %arg1: i32) -> (i32, i32, i32) {
    %c0_i32 = arith.constant 0 : i32
    %c0_i32_0 = arith.constant 0 : i32
    %c0_i32_1 = arith.constant 0 : i32
    return %arg0, %c0_i32, %c0_i32_0 : i32, i32, i32
  }
  func.func @transform_2(%arg0: i32, %arg1: i32) -> (i32, i32, i32) {
    %c0_i32 = arith.constant 0 : i32
    %c0_i32_0 = arith.constant 0 : i32
    %c0_i32_1 = arith.constant 0 : i32
    return %arg0, %c0_i32, %c0_i32_0 : i32, i32, i32
  }
}

module attributes {stable_mosaic.version = 11 : i64} {
  func.func @_affine_kernel(%arg0: i32, %arg1: memref<2xf32, #tpu.memory_space<smem>>, %arg2: memref<8x256xf32, #tpu.memory_space<vmem>>, %arg3: memref<8x256xf32, #tpu.memory_space<vmem>>) attributes {dimension_semantics = [#tpu.dimension_semantics<parallel>], iteration_bounds = array<i64: 1>, scalar_prefetch = 0 : i64, scratch_operands = 0 : i64, tpu.core_type = #tpu.core_type<tc>, window_params = [{transform_indices = @transform_0, window_bounds = array<i64: 2>}, {transform_indices = @transform_1, window_bounds = array<i64: 8, 256>}, {transform_indices = @transform_2, window_bounds = array<i64: 8, 256>}]} {
    %c0 = arith.constant 0 : index
    %0 = memref.load %arg1[%c0] : memref<2xf32, #tpu.memory_space<smem>>
    %c1 = arith.constant 1 : index
    %1 = memref.load %arg1[%c1] : memref<2xf32, #tpu.memory_space<smem>>
    %c0_0 = arith.constant 0 : index
    %c0_1 = arith.constant 0 : index
    %2 = vector.load %arg2[%c0_0, %c0_1] : memref<8x256xf32, #tpu.memory_space<vmem>>, vector<8x256xf32>
    %3 = vector.broadcast %0 : f32 to vector<8x256xf32>
    %4 = arith.mulf %2, %3 : vector<8x256xf32>
    %5 = vector.broadcast %1 : f32 to vector<8x256xf32>
    %6 = arith.addf %4, %5 : vector<8x256xf32>
    %c0_2 = arith.constant 0 : index
    %c0_3 = arith.constant 0 : index
    %7 = vector.load %arg3[%c0_2, %c0_3] : memref<8x256xf32, #tpu.memory_space<vmem>>, vector<8x256xf32>
    tpu.vector_store %arg3[%c0_2, %c0_3], %6 {strides = array<i32>} : memref<8x256xf32, #tpu.memory_space<vmem>>, vector<8x256xf32>,
    return
  }
  func.func @transform_0(%arg0: i32) -> i32 {
    %c0_i32 = arith.constant 0 : i32
    %c0_i32_0 = arith.constant 0 : i32
    return %c0_i32 : i32
  }
  func.func @transform_1(%arg0: i32) -> (i32, i32) {
    %c0_i32 = arith.constant 0 : i32
    %c0_i32_0 = arith.constant 0 : i32
    return %arg0, %c0_i32 : i32, i32
  }
  func.func @transform_2(%arg0: i32) -> (i32, i32) {
    %c0_i32 = arith.constant 0 : i32
    %c0_i32_0 = arith.constant 0 : i32
    return %arg0, %c0_i32 : i32, i32
  }
}

</mosaic_0001>

<llo_original>
// kernel: dual_rnn_attention_forward.2
$region0: #{dual_rnn_attention_forward.2}
  #allocation0 [shape = 'u32[]', space=smem, size = 0x4, offset = 0x4, fixed_abs, tag = 'smem constant byte address 0x4 - core index']
  #allocation1 [shape = 'u32[144,128]{1,0:T(1,128)}', space=vmem, size = 0x12000, scoped, tag = 'internal scratch']
  #allocation2 [shape = 'f32[8,256]{1,0:T(8,128)}', space=vmem, size = 0x2000, scoped, tag = 'scratch operand']
  #allocation3 [shape = 'f32[8,256]{1,0:T(8,128)}', space=vmem, size = 0x2000, scoped, tag = 'scratch operand']
  %s0 = inlined_call_operand.vmem [shape: f32[8,256], index: 0, kind: input, shape index: {}]
  %s1 = inlined_call_operand.vmem [shape: f32[1,8,128], index: 1, kind: output, shape index: {0}]
  %s2 = inlined_call_operand.vmem [shape: f32[1,8,128], index: 2, kind: output, shape index: {1}]
  %3 = xla_tuple %s1, %s2
  %s4 = sld [smem:[#allocation0]]
  $region30: #{dual_rnn_attention_forward.2} parent=0
    _
  %s6 = ssub.s32 1, %s4
  %s7 = scalar_select 0, %s6, %s4
  // Predicated region
  $region2: #{dual_rnn_attention_forward.2} parent=0 // pred_check
    _
  $region3: #{dual_rnn_attention_forward.2} parent=0 // pred_check_branch
    %9 = sbr.rel (0) target = $region5
  $region4: #{dual_rnn_attention_forward.2} parent=0 // pred_region
    %s10 = sadd.s32 0, 0
    %p11 = scmp.lt.s32.totalorder %s10, 0
    %s12 = scalar_select %p11, %s10, 0
    %s13 = smul.addr %s12, 2
    %s14 = smul.addr %s13, 8
    %s15 = scalar_lea.vmem %s0, %s14
    %s16 = sadd.s32 0, 0
  $region5: #{dual_rnn_attention_forward.2} parent=0 // pred_fallthru
    _
  %s17 = sadd.s32 0, 0
  %p18 = scmp.lt.s32.totalorder %s17, 0
  %s19 = scalar_select %p18, %s17, 0
  %s20 = smul.addr %s19, 2
  %s21 = smul.addr %s20, 8
  %s22 = scalar_lea.vmem %s0, %s21
  %s23 = sadd.s32 0, 0
  %p24 = scmp.lt.s32.totalorder %s23, 0
  %s25 = scalar_select %p24, %s23, 0
  %s26 = smul.addr %s25, 2
  %s27 = smul.addr %s26, 8
  %s28 = scalar_lea.vmem %s0, %s27
  %s29 = sadd.s32 0, 0
  %p30 = scmp.eq.s32.totalorder 0, 0
  // Predicated region
  $region6: #{dual_rnn_attention_forward.2} parent=0 // pred_check
    %p31 = pneg %p30
  $region7: #{dual_rnn_attention_forward.2} parent=0 // pred_check_branch
    %33 = sbr.rel (%p31) target = $region9
  $region8: #{dual_rnn_attention_forward.2} parent=0 // pred_region
    %34 = vst [vmem:[#allocation2] sm:$0xff] 0.0
    %35 = vst [vmem:[#allocation2 + $0x8] sm:$0xff] 0.0
    %36 = vst [vmem:[#allocation3] sm:$0xff] 0.0
    %37 = vst [vmem:[#allocation3 + $0x8] sm:$0xff] 0.0
  $region9: #{dual_rnn_attention_forward.2} parent=0 // pred_fallthru
    _
  %v38 = vld [vmem:[%s28] sm:$0xff]
  %v39 = vld [vmem:[%s28 + $0x8] sm:$0xff]
  %v40 = vld [vmem:[#allocation2] sm:$0xff]
  %v41 = vld [vmem:[#allocation2 + $0x8] sm:$0xff]
  %v42 = vadd.f32 %v38, 0.0
  %v43 = vadd.f32 %v39, 0.0
  %v44 = vadd.f32 %v40, %v42
  %v45 = vadd.f32 %v41, %v43
  %46 = vst [vmem:[#allocation2] sm:$0xff] %v44
  %47 = vst [vmem:[#allocation2 + $0x8] sm:$0xff] %v45
  %v48 = vld [vmem:[#allocation3] sm:$0xff]
  %v49 = vld [vmem:[#allocation3 + $0x8] sm:$0xff]
  %v50 = vmul.f32 %v38, %v38
  %v51 = vmul.f32 %v39, %v39
  %v52 = vadd.f32 %v50, 0.0
  %v53 = vadd.f32 %v51, 0.0
  %v54 = vadd.f32 %v48, %v52
  %v55 = vadd.f32 %v49, %v53
  %56 = vst [vmem:[#allocation3] sm:$0xff] %v54
  %57 = vst [vmem:[#allocation3 + $0x8] sm:$0xff] %v55
  // Predicated region
  $region10: #{dual_rnn_attention_forward.2} parent=0 // pred_check
    %p58 = pneg %p30
  $region11: #{dual_rnn_attention_forward.2} parent=0 // pred_check_branch
    %60 = sbr.rel (%p58) target = $region13
  $region12: #{dual_rnn_attention_forward.2} parent=0 // pred_region
    %v61 = vld [vmem:[#allocation2] sm:$0xff]
    %v62 = vld [vmem:[#allocation2 + $0x8] sm:$0xff]
    %v63 = vadd.f32 %v61, %v62
    %64 = vadd.xlane.f32.xlu0 %v63
    %v65 = vpop.xlane.xlu0 %64
    %v66 = vrot.slane %v65, 4
    %v67 = vadd.f32 %v65, %v66
    %v68 = vrot.slane %v67, 2
    %v69 = vadd.f32 %v67, %v68
    %v70 = vrot.slane %v69, 1
    %v71 = vadd.f32 %v69, %v70
    %s72 = vtos %v71
    %v73 = vstv %s72
    %74 = vst [vmem:[%s1] sm:$0xff] %v73
    %v75 = vld [vmem:[#allocation3] sm:$0xff]
    %v76 = vld [vmem:[#allocation3 + $0x8] sm:$0xff]
    %v77 = vadd.f32 %v75, %v76
    %78 = vadd.xlane.f32.xlu0 %v77
    %v79 = vpop.xlane.xlu0 %78
    %v80 = vrot.slane %v79, 4
    %v81 = vadd.f32 %v79, %v80
    %v82 = vrot.slane %v81, 2
    %v83 = vadd.f32 %v81, %v82
    %v84 = vrot.slane %v83, 1
    %v85 = vadd.f32 %v83, %v84
    %s86 = vtos %v85
    %v87 = vstv %s86
    %88 = vst [vmem:[%s2] sm:$0xff] %v87
  $region13: #{dual_rnn_attention_forward.2} parent=0 // pred_fallthru
    _
  // Predicated region
  $region14: #{dual_rnn_attention_forward.2} parent=0 // pred_check
    _
  $region15: #{dual_rnn_attention_forward.2} parent=0 // pred_check_branch
    %90 = sbr.rel (0) target = $region17
  $region16: #{dual_rnn_attention_forward.2} parent=0 // pred_region
    _
  $region17: #{dual_rnn_attention_forward.2} parent=0 // pred_fallthru
    _
  // Predicated region
  $region18: #{dual_rnn_attention_forward.2} parent=0 // pred_check
    _
  $region19: #{dual_rnn_attention_forward.2} parent=0 // pred_check_branch
    %92 = sbr.rel (0) target = $region21
  $region20: #{dual_rnn_attention_forward.2} parent=0 // pred_region
    _
  $region21: #{dual_rnn_attention_forward.2} parent=0 // pred_fallthru
    _
  // Predicated region
  $region22: #{dual_rnn_attention_forward.2} parent=0 // pred_check
    _
  $region23: #{dual_rnn_attention_forward.2} parent=0 // pred_check_branch
    %94 = sbr.rel (0) target = $region25
  $region24: #{dual_rnn_attention_forward.2} parent=0 // pred_region
    _
  $region25: #{dual_rnn_attention_forward.2} parent=0 // pred_fallthru
    _
  // Predicated region
  $region26: #{dual_rnn_attention_forward.2} parent=0 // pred_check
    _
  $region27: #{dual_rnn_attention_forward.2} parent=0 // pred_check_branch
    %96 = sbr.rel (0) target = $region29
  $region28: #{dual_rnn_attention_forward.2} parent=0 // pred_region
    _
  $region29: #{dual_rnn_attention_forward.2} parent=0 // pred_fallthru
    _

// kernel: dual_rnn_attention_forward.3
$region0: #{dual_rnn_attention_forward.3}
  #allocation0 [shape = 'u32[]', space=smem, size = 0x4, offset = 0x4, fixed_abs, tag = 'smem constant byte address 0x4 - core index']
  #allocation1 [shape = 'u32[144,128]{1,0:T(1,128)}', space=vmem, size = 0x12000, scoped, tag = 'internal scratch']
  %s0 = inlined_call_operand.vmem [shape: f32[2], index: 0, kind: input, shape index: {}]
  %s1 = inlined_call_operand.vmem [shape: f32[8,256], index: 1, kind: input, shape index: {}]
  %s2 = inlined_call_operand.vmem [shape: f32[8,256], index: 2, kind: output, shape index: {}]
  %s3 = sld [smem:[#allocation0]]
  $region22: #{dual_rnn_attention_forward.3} parent=0
    _
  %s5 = ssub.s32 1, %s3
  %s6 = scalar_select 0, %s5, %s3
  $region1: #{dual_rnn_attention_forward.3} parent=0
    #allocation2 [shape = 'u8[512]{0}', space=smem, size = 0x200, scoped, tag = 'input window, operand 0, single buffered']
    #allocation3 [shape = 's32[1]{0}', space=sflag, size = 0x4, scoped, tag = 'scoped memory for dual_rnn_attention_forward.3']
    %7 = vsyncpa [#allocation3], 0
    // Predicated region
    $region2: #{dual_rnn_attention_forward.3} parent=1 // pred_check
      _
    $region3: #{dual_rnn_attention_forward.3} parent=1 // pred_check_branch
      %9 = sbr.rel (0) target = $region5
    $region4: #{dual_rnn_attention_forward.3} parent=1 // pred_region
      %s11 = ssub.s32 16, 16
      %12 = vsyncadd [#allocation3], %s11
      %s14 = sshll.u32 %s0, 4
      %s15 = int_to_ptr.vmem [resolvable:$true] %s14
      %17 = dma.vmem_to_smem %s15, 16, [#allocation2], [#allocation3]
    $region5: #{dual_rnn_attention_forward.3} parent=1 // pred_fallthru
      _
    // Predicated region
    $region6: #{dual_rnn_attention_forward.3} parent=1 // pred_check
      _
    $region7: #{dual_rnn_attention_forward.3} parent=1 // pred_check_branch
      %19 = sbr.rel (0) target = $region9
    $region8: #{dual_rnn_attention_forward.3} parent=1 // pred_region
      _
    $region9: #{dual_rnn_attention_forward.3} parent=1 // pred_fallthru
      _
    // Predicated region
    $region10: #{dual_rnn_attention_forward.3} parent=1 // pred_check
      _
    $region11: #{dual_rnn_attention_forward.3} parent=1 // pred_check_branch
      %21 = sbr.rel (0) target = $region13
    $region12: #{dual_rnn_attention_forward.3} parent=1 // pred_region
      %22 = dma.done [#allocation3], 16
    $region13: #{dual_rnn_attention_forward.3} parent=1 // pred_fallthru
      _
    %23 = sfence
    %s24 = sld [smem:[#allocation2]]
    %s25 = sld [smem:[#allocation2 + $0x1]]
    %v26 = vld [vmem:[%s1] sm:$0xff]
    %v27 = vld [vmem:[%s1 + $0x8] sm:$0xff]
    %v28 = vstv %s24
    %v29 = vmul.f32 %v26, %v28
    %v30 = vmul.f32 %v27, %v28
    %v31 = vstv %s25
    %v32 = vadd.f32 %v29, %v31
    %v33 = vadd.f32 %v30, %v31
    %34 = vst [vmem:[%s2] sm:$0xff] %v32
    %35 = vst [vmem:[%s2 + $0x8] sm:$0xff] %v33
    // Predicated region
    $region14: #{dual_rnn_attention_forward.3} parent=1 // pred_check
      _
    $region15: #{dual_rnn_attention_forward.3} parent=1 // pred_check_branch
      %37 = sbr.rel (0) target = $region17
    $region16: #{dual_rnn_attention_forward.3} parent=1 // pred_region
      _
    $region17: #{dual_rnn_attention_forward.3} parent=1 // pred_fallthru
      _
    // Predicated region
    $region18: #{dual_rnn_attention_forward.3} parent=1 // pred_check
      _
    $region19: #{dual_rnn_attention_forward.3} parent=1 // pred_check_branch
      %39 = sbr.rel (0) target = $region21
    $region20: #{dual_rnn_attention_forward.3} parent=1 // pred_region
      _
    $region21: #{dual_rnn_attention_forward.3} parent=1 // pred_fallthru
      _
    %40 = vsyncpa [#allocation3], 1

</llo_original>
